<compile_context>
chip_gen: v6e
topology: v6e:2x2x1
jax: 0.10.0
libtpu: 0.0.40
codegen_flags: <defaults>
</compile_context>

<pallas_src>
import jax
import jax.numpy as jnp
from jax.experimental import pallas as pl
from jax.experimental.pallas import tpu as pltpu

IN_FEATURES = 5
LATENT_DIM = 4


def _dummy_encoder_kernel(w_ref, b_ref, xt_ref, y_ref):
    # w_ref : (N, K)  = (latent_dim, 5)   -- tiny, resident in VMEM
    # b_ref : (N, 1)
    # xt_ref: (K, TB)                      -- batch on lanes (lane-dense)
    # y_ref : (N, TB)
    w = w_ref[...]
    b = b_ref[...]
    xt = xt_ref[...]
    k_dim = xt.shape[0]

    # y[n, :] = b[n] + sum_k w[n, k] * x[k, :]  -- 5 VPU broadcast multiply-adds,
    # unrolled at trace time; no MXU round trip.
    acc = b + w[:, 0:1] * xt[0:1, :]
    for k in range(1, k_dim):
        acc = acc + w[:, k : k + 1] * xt[k : k + 1, :]
    y_ref[...] = acc.astype(y_ref.dtype)


def dummy_encoder_forward(x, weight, bias, *, block_b=8192):
    """PyTorch-layout params: x (B, 5), weight (latent_dim, 5), bias (latent_dim,).

    Returns (y, z) with y = x @ weight.T + bias and z = zeros((B, latent_dim)),
    matching DummyEncoder.forward.
    """
    B, k_dim = x.shape
    n_dim = weight.shape[0]
    dtype = x.dtype

    # Lane-dense layout: batch on the last axis (wrapper-side transposes are
    # cheap XLA glue; the kernel streams full 128-lane vregs).
    xt = x.T                                # (K, B)
    b2 = bias.reshape(n_dim, 1)             # (N, 1)

    if B <= block_b:
        # Single full-extent block: block_shape == array dims satisfies the
        # (8,128) tiling rule regardless of B.
        tb = B
        b_padded = B
        xt_p = xt
    else:
        # Tile the lane axis; tile must be a multiple of 128 -> pad B.
        tb = block_b
        num_blocks = pl.cdiv(B, tb)
        b_padded = num_blocks * tb
        xt_p = jnp.pad(xt, ((0, 0), (0, b_padded - B)))

    grid = (b_padded // tb,)

    yt_p = pl.pallas_call(
        _dummy_encoder_kernel,
        out_shape=jax.ShapeDtypeStruct((n_dim, b_padded), dtype),
        grid=grid,
        in_specs=[
            pl.BlockSpec((n_dim, k_dim), lambda i: (0, 0)),   # weight (replicated)
            pl.BlockSpec((n_dim, 1), lambda i: (0, 0)),       # bias   (replicated)
            pl.BlockSpec((k_dim, tb), lambda i: (0, i)),      # x tile, batch on lanes
        ],
        out_specs=pl.BlockSpec((n_dim, tb), lambda i: (0, i)),
        compiler_params=pltpu.CompilerParams(
            dimension_semantics=("parallel",),                 # 2-TC sharding on v7x
        ),
    )(weight, b2, xt_p)

    y = yt_p[:, :B].T                                          # back to (B, latent_dim)
    # zeros side-output produced outside the kernel: no HBM writeback stream burned.
    z = jnp.zeros((B, n_dim), dtype=dtype)
    return y, z


if __name__ == "__main__":
    key = jax.random.PRNGKey(0)
    kx, kw, kb = jax.random.split(key, 3)

    # Shapes implied by DummyEncoder: nn.Linear(5, latent_dim=4), small batch.
    batch = 8
    weight = jax.random.normal(kw, (LATENT_DIM, IN_FEATURES), dtype=jnp.float32) * 0.1
    bias = jax.random.normal(kb, (LATENT_DIM,), dtype=jnp.float32) * 0.1
    x = jax.random.normal(kx, (batch, IN_FEATURES), dtype=jnp.float32)

    y, z = dummy_encoder_forward(x, weight, bias)
    jax.block_until_ready((y, z))

    y_ref = x @ weight.T + bias
    assert jnp.allclose(y, y_ref, atol=1e-5), "linear output mismatch"
    assert z.shape == (batch, LATENT_DIM) and bool(jnp.all(z == 0.0)), "zeros output mismatch"

    # Also exercise the tiled (padded, multi-block) path with a non-multiple batch.
    batch2 = 300
    x2 = jax.random.normal(kx, (batch2, IN_FEATURES), dtype=jnp.float32)
    y2, z2 = dummy_encoder_forward(x2, weight, bias, block_b=128)
    jax.block_until_ready((y2, z2))
    y2_ref = x2 @ weight.T + bias
    assert jnp.allclose(y2, y2_ref, atol=1e-5), "tiled-path linear output mismatch"
    assert z2.shape == (batch2, LATENT_DIM) and bool(jnp.all(z2 == 0.0)), "tiled-path zeros mismatch"

    print("KERNEL_OK")
</pallas_src>

<mosaic_0001>
module attributes {stable_mosaic.version = 11 : i64} {
  func.func @_dummy_encoder_kernel(%arg0: i32, %arg1: memref<4x5xf32, #tpu.memory_space<vmem>>, %arg2: memref<4x1xf32, #tpu.memory_space<vmem>>, %arg3: memref<5x8xf32, #tpu.memory_space<vmem>>, %arg4: memref<4x8xf32, #tpu.memory_space<vmem>>) attributes {dimension_semantics = [#tpu.dimension_semantics<parallel>], iteration_bounds = array<i64: 1>, scalar_prefetch = 0 : i64, scratch_operands = 0 : i64, tpu.core_type = #tpu.core_type<tc>, window_params = [{pipeline_mode = #tpu.pipeline_mode<synchronous>, transform_indices = @transform_0, window_bounds = array<i64: 4, 5>}, {pipeline_mode = #tpu.pipeline_mode<synchronous>, transform_indices = @transform_1, window_bounds = array<i64: 4, 1>}, {transform_indices = @transform_2, window_bounds = array<i64: 5, 8>}, {transform_indices = @transform_3, window_bounds = array<i64: 4, 8>}]} {
    %c0 = arith.constant 0 : index
    %c0_0 = arith.constant 0 : index
    %0 = vector.load %arg1[%c0, %c0_0] : memref<4x5xf32, #tpu.memory_space<vmem>>, vector<4x5xf32>
    %c0_1 = arith.constant 0 : index
    %c0_2 = arith.constant 0 : index
    %1 = vector.load %arg2[%c0_1, %c0_2] : memref<4x1xf32, #tpu.memory_space<vmem>>, vector<4x1xf32>
    %c0_3 = arith.constant 0 : index
    %c0_4 = arith.constant 0 : index
    %2 = vector.load %arg3[%c0_3, %c0_4] : memref<5x8xf32, #tpu.memory_space<vmem>>, vector<5x8xf32>
    %3 = vector.extract_strided_slice %0 {offsets = [0, 0], sizes = [4, 1], strides = [1, 1]} : vector<4x5xf32> to vector<4x1xf32>
    %4 = vector.extract_strided_slice %2 {offsets = [0, 0], sizes = [1, 8], strides = [1, 1]} : vector<5x8xf32> to vector<1x8xf32>
    %5 = vector.broadcast %3 : vector<4x1xf32> to vector<4x8xf32>
    %6 = vector.broadcast %4 : vector<1x8xf32> to vector<4x8xf32>
    %7 = arith.mulf %5, %6 : vector<4x8xf32>
    %8 = vector.broadcast %1 : vector<4x1xf32> to vector<4x8xf32>
    %9 = arith.addf %8, %7 : vector<4x8xf32>
    %10 = vector.extract_strided_slice %0 {offsets = [0, 1], sizes = [4, 1], strides = [1, 1]} : vector<4x5xf32> to vector<4x1xf32>
    %11 = vector.extract_strided_slice %2 {offsets = [1, 0], sizes = [1, 8], strides = [1, 1]} : vector<5x8xf32> to vector<1x8xf32>
    %12 = vector.broadcast %10 : vector<4x1xf32> to vector<4x8xf32>
    %13 = vector.broadcast %11 : vector<1x8xf32> to vector<4x8xf32>
    %14 = arith.mulf %12, %13 : vector<4x8xf32>
    %15 = arith.addf %9, %14 : vector<4x8xf32>
    %16 = vector.extract_strided_slice %0 {offsets = [0, 2], sizes = [4, 1], strides = [1, 1]} : vector<4x5xf32> to vector<4x1xf32>
    %17 = vector.extract_strided_slice %2 {offsets = [2, 0], sizes = [1, 8], strides = [1, 1]} : vector<5x8xf32> to vector<1x8xf32>
    %18 = vector.broadcast %16 : vector<4x1xf32> to vector<4x8xf32>
    %19 = vector.broadcast %17 : vector<1x8xf32> to vector<4x8xf32>
    %20 = arith.mulf %18, %19 : vector<4x8xf32>
    %21 = arith.addf %15, %20 : vector<4x8xf32>
    %22 = vector.extract_strided_slice %0 {offsets = [0, 3], sizes = [4, 1], strides = [1, 1]} : vector<4x5xf32> to vector<4x1xf32>
    %23 = vector.extract_strided_slice %2 {offsets = [3, 0], sizes = [1, 8], strides = [1, 1]} : vector<5x8xf32> to vector<1x8xf32>
    %24 = vector.broadcast %22 : vector<4x1xf32> to vector<4x8xf32>
    %25 = vector.broadcast %23 : vector<1x8xf32> to vector<4x8xf32>
    %26 = arith.mulf %24, %25 : vector<4x8xf32>
    %27 = arith.addf %21, %26 : vector<4x8xf32>
    %28 = vector.extract_strided_slice %0 {offsets = [0, 4], sizes = [4, 1], strides = [1, 1]} : vector<4x5xf32> to vector<4x1xf32>
    %29 = vector.extract_strided_slice %2 {offsets = [4, 0], sizes = [1, 8], strides = [1, 1]} : vector<5x8xf32> to vector<1x8xf32>
    %30 = vector.broadcast %28 : vector<4x1xf32> to vector<4x8xf32>
    %31 = vector.broadcast %29 : vector<1x8xf32> to vector<4x8xf32>
    %32 = arith.mulf %30, %31 : vector<4x8xf32>
    %33 = arith.addf %27, %32 : vector<4x8xf32>
    %c0_5 = arith.constant 0 : index
    %c0_6 = arith.constant 0 : index
    %34 = vector.load %arg4[%c0_5, %c0_6] : memref<4x8xf32, #tpu.memory_space<vmem>>, vector<4x8xf32>
    tpu.vector_store %arg4[%c0_5, %c0_6], %33 {strides = array<i32>} : memref<4x8xf32, #tpu.memory_space<vmem>>, vector<4x8xf32>,
    return
  }
  func.func @transform_0(%arg0: i32) -> (i32, i32) {
    %c0_i32 = arith.constant 0 : i32
    %c0_i32_0 = arith.constant 0 : i32
    %c0_i32_1 = arith.constant 0 : i32
    return %c0_i32, %c0_i32_0 : i32, i32
  }
  func.func @transform_1(%arg0: i32) -> (i32, i32) {
    %c0_i32 = arith.constant 0 : i32
    %c0_i32_0 = arith.constant 0 : i32
    %c0_i32_1 = arith.constant 0 : i32
    return %c0_i32, %c0_i32_0 : i32, i32
  }
  func.func @transform_2(%arg0: i32) -> (i32, i32) {
    %c0_i32 = arith.constant 0 : i32
    %c0_i32_0 = arith.constant 0 : i32
    return %c0_i32, %arg0 : i32, i32
  }
  func.func @transform_3(%arg0: i32) -> (i32, i32) {
    %c0_i32 = arith.constant 0 : i32
    %c0_i32_0 = arith.constant 0 : i32
    return %c0_i32, %arg0 : i32, i32
  }
}

</mosaic_0001>

<llo_original>
// kernel: tpu_custom_call.1
$region0: #{tpu_custom_call.1}
  #allocation0 [shape = 'u32[]', space=smem, size = 0x4, offset = 0x4, fixed_abs, tag = 'smem constant byte address 0x4 - core index']
  #allocation1 [shape = 'u32[144,128]{1,0:T(1,128)}', space=vmem, size = 0x12000, scoped, tag = 'internal scratch']
  %s0 = inlined_call_operand.hbm [shape: f32[4,5], index: 0, kind: input, shape index: {}]
  %s1 = inlined_call_operand.vmem [shape: f32[4,1], index: 1, kind: input, shape index: {}]
  %s2 = inlined_call_operand.vmem [shape: f32[5,8], index: 2, kind: input, shape index: {}]
  %s3 = inlined_call_operand.hbm [shape: f32[4,8], index: 3, kind: output, shape index: {}]
  %s4 = sld [smem:[#allocation0]]
  $region26: #{tpu_custom_call.1} parent=0
    _
  %s6 = ssub.s32 1, %s4
  %s7 = scalar_select 0, %s6, %s4
  $region1: #{tpu_custom_call.1} parent=0
    #allocation2 [shape = 'u8[2048]{0}', space=vmem, size = 0x800, scoped, tag = 'input window, operand 0, single buffered']
    #allocation3 [shape = 's32[1]{0}', space=sflag, size = 0x4, scoped, tag = 'scoped memory for tpu_custom_call.1']
    #allocation4 [shape = 's32[1]{0}', space=sflag, size = 0x4, scoped, tag = 'scoped memory for tpu_custom_call.1']
    #allocation5 [shape = 'u8[2048]{0}', space=vmem, size = 0x800, scoped, tag = 'output window, operand 0, single buffered']
    %8 = vsyncpa [#allocation3], 0
    %9 = vsyncpa [#allocation4], 0
    // Predicated region
    $region2: #{tpu_custom_call.1} parent=1 // pred_check
      _
    $region3: #{tpu_custom_call.1} parent=1 // pred_check_branch
      %11 = sbr.rel (0) target = $region5
    $region4: #{tpu_custom_call.1} parent=1 // pred_region
      %s13 = ssub.s32 64, 64
      %14 = vsyncadd [#allocation3], %s13
      %s16 = sshll.u32 [#allocation2], 4
      %s17 = int_to_ptr.vmem [resolvable:$true] %s16
      %19 = dma.hbm_to_vmem [thread:$0]  %s0, 64, %s17, [#allocation3]
    $region5: #{tpu_custom_call.1} parent=1 // pred_fallthru
      _
    // Predicated region
    $region6: #{tpu_custom_call.1} parent=1 // pred_check
      _
    $region7: #{tpu_custom_call.1} parent=1 // pred_check_branch
      %21 = sbr.rel (0) target = $region9
    $region8: #{tpu_custom_call.1} parent=1 // pred_region
      _
    $region9: #{tpu_custom_call.1} parent=1 // pred_fallthru
      _
    // Predicated region
    $region10: #{tpu_custom_call.1} parent=1 // pred_check
      _
    $region11: #{tpu_custom_call.1} parent=1 // pred_check_branch
      %23 = sbr.rel (0) target = $region13
    $region12: #{tpu_custom_call.1} parent=1 // pred_region
      _
    $region13: #{tpu_custom_call.1} parent=1 // pred_fallthru
      _
    // Predicated region
    $region14: #{tpu_custom_call.1} parent=1 // pred_check
      _
    $region15: #{tpu_custom_call.1} parent=1 // pred_check_branch
      %25 = sbr.rel (0) target = $region17
    $region16: #{tpu_custom_call.1} parent=1 // pred_region
      %26 = dma.done [#allocation3], 64
    $region17: #{tpu_custom_call.1} parent=1 // pred_fallthru
      _
    %v27 = vld [vmem:[#allocation2] sm:$0xf]
    %v28 = vld [vmem:[%s1] sm:$0xf]
    %v29 = vld [vmem:[%s2] sm:$0x1f]
    %31 = vset.pattern.permute.xlu0 0
    %32 = vperm.xlu0 %31, %v27
    %v33 = vpop.permute.xlu0 %32
    %v35 = vlaneseq
    %v36 = vshrl.u32 %v35, 7
    %v37 = vsub.s32 0, %v36
    %v38 = vrot.slane %v29, %v37
    %v39 = vmul.f32 %v33, %v38
    %41 = vset.pattern.permute.xlu0 0
    %42 = vperm.xlu0 %41, %v28
    %v43 = vpop.permute.xlu0 %42
    %v45 = vadd.f32 %v43, %v39
    %46 = vset.pattern.permute.xlu0 1
    %47 = vperm.xlu0 %46, %v27
    %v48 = vpop.permute.xlu0 %47
    %v50 = vlaneseq
    %v51 = vshrl.u32 %v50, 7
    %v52 = vsub.s32 1, %v51
    %v53 = vrot.slane %v29, %v52
    %v54 = vmul.f32 %v48, %v53
    %v55 = vadd.f32 %v45, %v54
    %56 = vset.pattern.permute.xlu0 2
    %57 = vperm.xlu0 %56, %v27
    %v58 = vpop.permute.xlu0 %57
    %v60 = vlaneseq
    %v61 = vshrl.u32 %v60, 7
    %v62 = vsub.s32 2, %v61
    %v63 = vrot.slane %v29, %v62
    %v64 = vmul.f32 %v58, %v63
    %v65 = vadd.f32 %v55, %v64
    %66 = vset.pattern.permute.xlu0 3
    %67 = vperm.xlu0 %66, %v27
    %v68 = vpop.permute.xlu0 %67
    %v70 = vlaneseq
    %v71 = vshrl.u32 %v70, 7
    %v72 = vsub.s32 3, %v71
    %v73 = vrot.slane %v29, %v72
    %v74 = vmul.f32 %v68, %v73
    %v75 = vadd.f32 %v65, %v74
    %76 = vset.pattern.permute.xlu0 4
    %77 = vperm.xlu0 %76, %v27
    %v78 = vpop.permute.xlu0 %77
    %v80 = vlaneseq
    %v81 = vshrl.u32 %v80, 7
    %v82 = vsub.s32 4, %v81
    %v83 = vrot.slane %v29, %v82
    %v84 = vmul.f32 %v78, %v83
    %v85 = vadd.f32 %v75, %v84
    %vm86 = vcmask 60416
    %87 = vst.msk [vmem:[#allocation5] sm:$0xf] %vm86, %v85
    // Predicated region
    $region18: #{tpu_custom_call.1} parent=1 // pred_check
      _
    $region19: #{tpu_custom_call.1} parent=1 // pred_check_branch
      %89 = sbr.rel (0) target = $region21
    $region20: #{tpu_custom_call.1} parent=1 // pred_region
      %s91 = ssub.s32 64, 64
      %92 = vsyncadd [#allocation4], %s91
      %s94 = sshll.u32 [#allocation5], 4
      %s95 = int_to_ptr.vmem [resolvable:$true] %s94
      %97 = dma.vmem_to_hbm [thread:$0]  %s95, 64, %s3, [#allocation4]
    $region21: #{tpu_custom_call.1} parent=1 // pred_fallthru
      _
    // Predicated region
    $region22: #{tpu_custom_call.1} parent=1 // pred_check
      _
    $region23: #{tpu_custom_call.1} parent=1 // pred_check_branch
      %99 = sbr.rel (0) target = $region25
    $region24: #{tpu_custom_call.1} parent=1 // pred_region
      %100 = dma.done [#allocation4], 64
    $region25: #{tpu_custom_call.1} parent=1 // pred_fallthru
      _
    %101 = vsyncpa [#allocation3], 1
    %102 = vsyncpa [#allocation4], 1

</llo_original>
